<compile_context>
chip_gen: v5e
topology: v5e:2x2
jax: 0.10.0
libtpu: 0.0.40
codegen_flags: <defaults>
</compile_context>

<pallas_src>
import functools

import jax
import jax.numpy as jnp
from jax import lax
from jax.experimental import pallas as pl
from jax.experimental.pallas import tpu as pltpu

TEMPERATURE = 0.1
# Per-norm clamp (||x|| clamped at EPS). torch's F.cosine_similarity clamps the
# product of norms; the two conventions agree for any non-degenerate input.
EPS = 1e-8
# Large finite negative used to mask padded key columns (finite so that the
# online-LSE update can never produce inf - inf = NaN).
_MASK_VALUE = -1e30


def _round_up(x, m):
    return (x + m - 1) // m * m


def _vmem_limit_bytes():
    """Scoped-VMEM limit to request: generous but safe on v5e/v6e/v7x."""
    cap = 64 * 1024 * 1024  # v7x per-core physical VMEM (smallest of the three)
    try:
        cap = int(pltpu.get_tpu_info().vmem_capacity_bytes)
    except Exception:
        pass
    return min(int(cap * 0.75), 100 * 1024 * 1024)


def _choose_tiles(b, d_pad, op_bytes, budget_bytes):
    """Pick (Tq, Tk): MXU-native streamed key tile, VMEM-sized resident query tile."""
    b8 = _round_up(b, 8)
    tk = min(256, b8)                                   # streamed key tile
    # Double-buffered key blocks are a fixed VMEM cost; each query row costs a
    # double-buffered operand row plus f32 logits/exp temporaries and scratch.
    fixed = 2 * tk * d_pad * op_bytes
    per_row = 2 * d_pad * op_bytes + 8 * tk * 4 + 64
    tq = (budget_bytes - fixed) // per_row
    tq = int(max(8, min(tq, 2048, b8)))
    if tq >= b8:
        tq = b8                                         # single resident query tile
    else:
        tq = max((tq // 8) * 8, 8)
    return tq, tk


def _l2_normalize_pad(a, rows_pad, d_pad, out_dtype):
    """Pre-pass: L2-normalize rows, cast to operand dtype, pad (all fused by XLA)."""
    r, d = a.shape
    a = a.astype(jnp.float32)
    inv = lax.rsqrt(jnp.maximum(jnp.sum(a * a, axis=-1, keepdims=True),
                                jnp.float32(EPS * EPS)))
    a_hat = (a * inv).astype(out_dtype)
    if rows_pad != r or d_pad != d:
        a_hat = jnp.pad(a_hat, ((0, rows_pad - r), (0, d_pad - d)))
    return a_hat


def _simcse_kernel(x_ref, y_ref, out_ref, m_sc, l_sc, p_sc, *,
                   b_true, tq, tk, inv_temp, mask_last):
    i = pl.program_id(0)            # query-row tile   ("parallel")
    j = pl.program_id(1)            # key-row tile     ("arbitrary", reduction)
    nj = pl.num_programs(1)

    @pl.when(j == 0)
    def _init():
        m_sc[...] = jnp.full_like(m_sc, -jnp.inf)
        l_sc[...] = jnp.zeros_like(l_sc)
        p_sc[...] = jnp.zeros_like(p_sc)

    # MXU: similarity tile of pre-normalized operands (bf16 in, f32 accumulate).
    s = lax.dot_general(x_ref[...], y_ref[...],
                        (((1,), (1,)), ((), ())),
                        preferred_element_type=jnp.float32)       # (Tq, Tk)
    # Apply 1/temperature to the f32 result (keeps bf16 operand mantissa).
    s = s * jnp.float32(inv_temp)

    def lse_update(logits):
        m_prev = m_sc[...]
        m_new = jnp.maximum(m_prev, jnp.max(logits, axis=-1, keepdims=True))
        l_sc[...] = (jnp.exp(m_prev - m_new) * l_sc[...]
                     + jnp.sum(jnp.exp(logits - m_new), axis=-1, keepdims=True))
        m_sc[...] = m_new

    if mask_last:  # static: only the LAST key tile can contain padded columns
        @pl.when(j == nj - 1)
        def _masked_update():
            col = j * tk + lax.broadcasted_iota(jnp.int32, s.shape, 1)
            lse_update(jnp.where(col < b_true, s, jnp.float32(_MASK_VALUE)))

        @pl.when(j < nj - 1)
        def _unmasked_update():
            lse_update(s)
    else:
        lse_update(s)

    # Positive logit: diagonal entries of the already-computed logits tile.
    # Only key tiles whose column range intersects this query tile's diagonal
    # contribute (Tq and Tk may differ).
    diag_here = jnp.logical_and(j * tk < (i + 1) * tq, (j + 1) * tk > i * tq)

    @pl.when(diag_here)
    def _pos():
        rowg = i * tq + lax.broadcasted_iota(jnp.int32, s.shape, 0)
        colg = j * tk + lax.broadcasted_iota(jnp.int32, s.shape, 1)
        p_sc[...] += jnp.sum(jnp.where(rowg == colg, s, 0.0),
                             axis=-1, keepdims=True)

    @pl.when(j == nj - 1)
    def _finalize():
        # per-row loss = logsumexp(logits_row) - positive_logit
        out_ref[...] = m_sc[...] + jnp.log(l_sc[...]) - p_sc[...]   # (Tq, 1)


def simcse_loss(sample, sample_aug, temperature=TEMPERATURE, *,
                operand_dtype=None, tile_q=None, tile_k=None):
    B, D = sample.shape
    assert sample_aug.shape == (B, D)

    # bf16 MXU operands by default (native on all generations, halves streamed
    # key bytes); pass operand_dtype=jnp.float32 for exact f32 logits.
    op_dtype = jnp.bfloat16 if operand_dtype is None else jnp.dtype(operand_dtype)
    op_bytes = jnp.dtype(op_dtype).itemsize

    d_pad = _round_up(D, 128)
    vmem_limit = _vmem_limit_bytes()
    auto_tq, auto_tk = _choose_tiles(B, d_pad, op_bytes, int(vmem_limit * 0.8))
    tk = auto_tk if tile_k is None else _round_up(min(int(tile_k), _round_up(B, 8)), 8)
    tq = auto_tq if tile_q is None else _round_up(min(int(tile_q), _round_up(B, 8)), 8)

    b_padq = _round_up(B, tq)       # query rows padded to a multiple of Tq
    b_padk = _round_up(B, tk)       # key rows padded to a multiple of Tk
    n_q, n_k = b_padq // tq, b_padk // tk
    mask_last = (b_padk != B)       # only the last key tile can hold padding

    # One-shot pre-pass: normalize + cast + pad (fused XLA), done once per input.
    x = _l2_normalize_pad(sample, b_padq, d_pad, op_dtype)       # queries
    y = _l2_normalize_pad(sample_aug, b_padk, d_pad, op_dtype)   # keys

    kernel = functools.partial(
        _simcse_kernel,
        b_true=B, tq=tq, tk=tk,
        inv_temp=1.0 / float(temperature),
        mask_last=mask_last,
    )

    per_row = pl.pallas_call(
        kernel,
        out_shape=jax.ShapeDtypeStruct((b_padq, 1), jnp.float32),
        grid_spec=pltpu.PrefetchScalarGridSpec(
            num_scalar_prefetch=0,
            grid=(n_q, n_k),
            in_specs=[
                pl.BlockSpec((tq, d_pad), lambda i, j: (i, 0)),   # resident queries
                pl.BlockSpec((tk, d_pad), lambda i, j: (j, 0)),   # streamed keys
            ],
            out_specs=pl.BlockSpec((tq, 1), lambda i, j: (i, 0)),
            scratch_shapes=[
                pltpu.VMEM((tq, 1), jnp.float32),   # running max m
                pltpu.VMEM((tq, 1), jnp.float32),   # running sumexp l
                pltpu.VMEM((tq, 1), jnp.float32),   # positive (diagonal) logit
            ],
        ),
        compiler_params=pltpu.CompilerParams(
            # query tiles split across TensorCores (v7x megacore); key axis is
            # the online-LSE reduction -> "arbitrary".
            dimension_semantics=("parallel", "arbitrary"),
            vmem_limit_bytes=vmem_limit,
        ),
    )(x, y)

    # Drop padded rows; mean over the true batch size.
    return jnp.sum(per_row[:B, 0]) / B


def _ref_loss(x, y, temperature=TEMPERATURE, operand_dtype=jnp.float32):
    """Pure-JAX reference mirroring the torch module (optionally with bf16 operands)."""
    x = x.astype(jnp.float32)
    y = y.astype(jnp.float32)
    xh = x * lax.rsqrt(jnp.maximum(jnp.sum(x * x, -1, keepdims=True), EPS * EPS))
    yh = y * lax.rsqrt(jnp.maximum(jnp.sum(y * y, -1, keepdims=True), EPS * EPS))
    xh = xh.astype(operand_dtype).astype(jnp.float32)
    yh = yh.astype(operand_dtype).astype(jnp.float32)
    logits = jnp.dot(xh, yh.T, precision=lax.Precision.HIGHEST) / temperature
    lse = jax.scipy.special.logsumexp(logits, axis=-1)
    return jnp.mean(lse - jnp.diag(logits))


if __name__ == "__main__":
    key = jax.random.PRNGKey(0)
    k1, k2, k3, k4 = jax.random.split(key, 4)

    # Case 1: module-sized toy problem (single tile; D padded to 128 lanes),
    # default bf16-operand fast path, under jit.
    B, D = 8, 32
    sample = jax.random.normal(k1, (B, D), dtype=jnp.float32)
    sample_aug = sample + 0.1 * jax.random.normal(k2, (B, D), dtype=jnp.float32)
    loss = jax.jit(lambda a, b: simcse_loss(a, b))(sample, sample_aug)
    jax.block_until_ready(loss)
    ref1 = _ref_loss(sample, sample_aug, operand_dtype=jnp.bfloat16)
    assert jnp.allclose(loss, ref1, rtol=1e-2, atol=2e-3), (loss, ref1)

    # Case 2: decoupled Tq != Tk, padded rows/cols, multi-tile online-LSE,
    # diagonal spanning several key tiles, masked last key tile.
    B2, D2 = 40, 200
    s2 = jax.random.normal(k3, (B2, D2), dtype=jnp.float32)
    a2 = s2 + 0.1 * jax.random.normal(k4, (B2, D2), dtype=jnp.float32)

    # 2a: exact f32-operand path (tight tolerance, validates LSE/diag logic).
    loss2_f32 = simcse_loss(s2, a2, tile_q=32, tile_k=16,
                            operand_dtype=jnp.float32)
    jax.block_until_ready(loss2_f32)
    ref2_f32 = _ref_loss(s2, a2, operand_dtype=jnp.float32)
    assert jnp.allclose(loss2_f32, ref2_f32, rtol=1e-4, atol=1e-4), (
        loss2_f32, ref2_f32)

    # 2b: default bf16-operand path on the same tiled/padded grid.
    loss2_bf16 = simcse_loss(s2, a2, tile_q=32, tile_k=16)
    jax.block_until_ready(loss2_bf16)
    ref2_bf16 = _ref_loss(s2, a2, operand_dtype=jnp.bfloat16)
    assert jnp.allclose(loss2_bf16, ref2_bf16, rtol=1e-2, atol=2e-3), (
        loss2_bf16, ref2_bf16)

    # 2c: fully automatic tile selection + VMEM limit (single masked key tile).
    loss2_auto = simcse_loss(s2, a2)
    jax.block_until_ready(loss2_auto)
    assert jnp.allclose(loss2_auto, ref2_bf16, rtol=1e-2, atol=2e-3), (
        loss2_auto, ref2_bf16)

    print("KERNEL_OK")
</pallas_src>

<mosaic_0001>
module attributes {stable_mosaic.version = 11 : i64} {
  func.func @_simcse_kernel(%arg0: i32, %arg1: i32, %arg2: memref<8x128xbf16, #tpu.memory_space<vmem>>, %arg3: memref<8x128xbf16, #tpu.memory_space<vmem>>, %arg4: memref<8x1xf32, #tpu.memory_space<vmem>>, %arg5: memref<8x1xf32, #tpu.memory_space<vmem>>, %arg6: memref<8x1xf32, #tpu.memory_space<vmem>>, %arg7: memref<8x1xf32, #tpu.memory_space<vmem>>) attributes {dimension_semantics = [#tpu.dimension_semantics<parallel>, #tpu.dimension_semantics<arbitrary>], iteration_bounds = array<i64: 1, 1>, scalar_prefetch = 0 : i64, scratch_operands = 3 : i64, tpu.core_type = #tpu.core_type<tc>, window_params = [{transform_indices = @transform_0, window_bounds = array<i64: 8, 128>}, {transform_indices = @transform_1, window_bounds = array<i64: 8, 128>}, {transform_indices = @transform_2, window_bounds = array<i64: 8, 1>}]} {
    %c0_i32 = arith.constant 0 : i32
    %0 = arith.cmpi eq, %arg1, %c0_i32 : i32
    %1 = arith.extui %0 : i1 to i32
    %c0_i32_0 = arith.constant 0 : i32
    %2 = arith.cmpi ne, %1, %c0_i32_0 : i32
    scf.if %2 {
      %cst_22 = arith.constant 0xFF800000 : f32
      %38 = vector.broadcast %cst_22 : f32 to vector<8x1xf32>
      %c0_23 = arith.constant 0 : index
      %c0_24 = arith.constant 0 : index
      %39 = vector.load %arg5[%c0_23, %c0_24] : memref<8x1xf32, #tpu.memory_space<vmem>>, vector<8x1xf32>
      tpu.vector_store %arg5[%c0_23, %c0_24], %38 {strides = array<i32>} : memref<8x1xf32, #tpu.memory_space<vmem>>, vector<8x1xf32>,
      %cst_25 = arith.constant 0.000000e+00 : f32
      %40 = vector.broadcast %cst_25 : f32 to vector<8x1xf32>
      %c0_26 = arith.constant 0 : index
      %c0_27 = arith.constant 0 : index
      %41 = vector.load %arg6[%c0_26, %c0_27] : memref<8x1xf32, #tpu.memory_space<vmem>>, vector<8x1xf32>
      tpu.vector_store %arg6[%c0_26, %c0_27], %40 {strides = array<i32>} : memref<8x1xf32, #tpu.memory_space<vmem>>, vector<8x1xf32>,
      %cst_28 = arith.constant 0.000000e+00 : f32
      %42 = vector.broadcast %cst_28 : f32 to vector<8x1xf32>
      %c0_29 = arith.constant 0 : index
      %c0_30 = arith.constant 0 : index
      %43 = vector.load %arg7[%c0_29, %c0_30] : memref<8x1xf32, #tpu.memory_space<vmem>>, vector<8x1xf32>
      tpu.vector_store %arg7[%c0_29, %c0_30], %42 {strides = array<i32>} : memref<8x1xf32, #tpu.memory_space<vmem>>, vector<8x1xf32>,
    } else {
    }
    %c0 = arith.constant 0 : index
    %c0_1 = arith.constant 0 : index
    %3 = vector.load %arg2[%c0, %c0_1] : memref<8x128xbf16, #tpu.memory_space<vmem>>, vector<8x128xbf16>
    %c0_2 = arith.constant 0 : index
    %c0_3 = arith.constant 0 : index
    %4 = vector.load %arg3[%c0_2, %c0_3] : memref<8x128xbf16, #tpu.memory_space<vmem>>, vector<8x128xbf16>
    %cst = arith.constant dense<0.000000e+00> : vector<8x8xf32>
    %5 = tpu.matmul %3, %4, %cst {dimension_numbers = #tpu.dot_dimension_numbers<[1], [1], [0], [0], [0, 0, 1, 0], [], []>} : vector<8x128xbf16>, vector<8x128xbf16>, vector<8x8xf32> -> vector<8x8xf32>
    %cst_4 = arith.constant 1.000000e+01 : f32
    %6 = vector.broadcast %cst_4 : f32 to vector<8x8xf32>
    %7 = arith.mulf %5, %6 : vector<8x8xf32>
    %c0_5 = arith.constant 0 : index
    %c0_6 = arith.constant 0 : index
    %8 = vector.load %arg5[%c0_5, %c0_6] : memref<8x1xf32, #tpu.memory_space<vmem>>, vector<8x1xf32>
    %cst_7 = arith.constant dense<0xFF800000> : vector<8xf32>
    %9 = vector.multi_reduction <maximumf>, %7, %cst_7 [1] : vector<8x8xf32> to vector<8xf32>
    %10 = vector.shape_cast %9 : vector<8xf32> to vector<8x1xf32>
    %11 = arith.maximumf %8, %10 : vector<8x1xf32>
    %12 = arith.subf %8, %11 : vector<8x1xf32>
    %13 = math.exp %12 : vector<8x1xf32>
    %c0_8 = arith.constant 0 : index
    %c0_9 = arith.constant 0 : index
    %14 = vector.load %arg6[%c0_8, %c0_9] : memref<8x1xf32, #tpu.memory_space<vmem>>, vector<8x1xf32>
    %15 = arith.mulf %13, %14 : vector<8x1xf32>
    %16 = vector.broadcast %11 : vector<8x1xf32> to vector<8x8xf32>
    %17 = arith.subf %7, %16 : vector<8x8xf32>
    %18 = math.exp %17 : vector<8x8xf32>
    %cst_10 = arith.constant dense<0.000000e+00> : vector<8xf32>
    %19 = vector.multi_reduction <add>, %18, %cst_10 [1] : vector<8x8xf32> to vector<8xf32>
    %20 = vector.shape_cast %19 : vector<8xf32> to vector<8x1xf32>
    %21 = arith.addf %15, %20 : vector<8x1xf32>
    %c0_11 = arith.constant 0 : index
    %c0_12 = arith.constant 0 : index
    %22 = vector.load %arg6[%c0_11, %c0_12] : memref<8x1xf32, #tpu.memory_space<vmem>>, vector<8x1xf32>
    tpu.vector_store %arg6[%c0_11, %c0_12], %21 {strides = array<i32>} : memref<8x1xf32, #tpu.memory_space<vmem>>, vector<8x1xf32>,
    %c0_13 = arith.constant 0 : index
    %c0_14 = arith.constant 0 : index
    %23 = vector.load %arg5[%c0_13, %c0_14] : memref<8x1xf32, #tpu.memory_space<vmem>>, vector<8x1xf32>
    tpu.vector_store %arg5[%c0_13, %c0_14], %11 {strides = array<i32>} : memref<8x1xf32, #tpu.memory_space<vmem>>, vector<8x1xf32>,
    %c8_i32 = arith.constant 8 : i32
    %24 = arith.muli %arg1, %c8_i32 : i32
    %c1_i32 = arith.constant 1 : i32
    %25 = arith.addi %arg0, %c1_i32 : i32
    %c8_i32_15 = arith.constant 8 : i32
    %26 = arith.muli %25, %c8_i32_15 : i32
    %27 = arith.cmpi slt, %24, %26 : i32
    %c1_i32_16 = arith.constant 1 : i32
    %28 = arith.addi %arg1, %c1_i32_16 : i32
    %c8_i32_17 = arith.constant 8 : i32
    %29 = arith.muli %28, %c8_i32_17 : i32
    %c8_i32_18 = arith.constant 8 : i32
    %30 = arith.muli %arg0, %c8_i32_18 : i32
    %31 = arith.cmpi sgt, %29, %30 : i32
    %32 = arith.andi %27, %31 : i1
    %33 = arith.extui %32 : i1 to i32
    %c0_i32_19 = arith.constant 0 : i32
    %34 = arith.cmpi ne, %33, %c0_i32_19 : i32
    scf.if %34 {
      %c8_i32_22 = arith.constant 8 : i32
      %38 = arith.muli %arg0, %c8_i32_22 : i32
      %39 = tpu.iota {dimensions = array<i32: 0>} : vector<8x8xi32>
      %40 = vector.broadcast %38 : i32 to vector<8x8xi32>
      %41 = arith.addi %40, %39 : vector<8x8xi32>
      %c8_i32_23 = arith.constant 8 : i32
      %42 = arith.muli %arg1, %c8_i32_23 : i32
      %43 = tpu.iota {dimensions = array<i32: 1>} : vector<8x8xi32>
      %44 = vector.broadcast %42 : i32 to vector<8x8xi32>
      %45 = arith.addi %44, %43 : vector<8x8xi32>
      %c0_24 = arith.constant 0 : index
      %c0_25 = arith.constant 0 : index
      %46 = vector.load %arg7[%c0_24, %c0_25] : memref<8x1xf32, #tpu.memory_space<vmem>>, vector<8x1xf32>
      %47 = arith.cmpi eq, %41, %45 : vector<8x8xi32>
      %cst_26 = arith.constant 0.000000e+00 : f32
      %48 = vector.broadcast %cst_26 : f32 to vector<8x8xf32>
      %49 = arith.select %47, %7, %48 : vector<8x8xi1>, vector<8x8xf32>
      %cst_27 = arith.constant dense<0.000000e+00> : vector<8xf32>
      %50 = vector.multi_reduction <add>, %49, %cst_27 [1] : vector<8x8xf32> to vector<8xf32>
      %51 = vector.shape_cast %50 : vector<8xf32> to vector<8x1xf32>
      %52 = arith.addf %46, %51 : vector<8x1xf32>
      %c0_28 = arith.constant 0 : index
      %c0_29 = arith.constant 0 : index
      %53 = vector.load %arg7[%c0_28, %c0_29] : memref<8x1xf32, #tpu.memory_space<vmem>>, vector<8x1xf32>
      tpu.vector_store %arg7[%c0_28, %c0_29], %52 {strides = array<i32>} : memref<8x1xf32, #tpu.memory_space<vmem>>, vector<8x1xf32>,
    } else {
    }
    %c0_i32_20 = arith.constant 0 : i32
    %35 = arith.cmpi eq, %arg1, %c0_i32_20 : i32
    %36 = arith.extui %35 : i1 to i32
    %c0_i32_21 = arith.constant 0 : i32
    %37 = arith.cmpi ne, %36, %c0_i32_21 : i32
    scf.if %37 {
      %c0_22 = arith.constant 0 : index
      %c0_23 = arith.constant 0 : index
      %38 = vector.load %arg5[%c0_22, %c0_23] : memref<8x1xf32, #tpu.memory_space<vmem>>, vector<8x1xf32>
      %c0_24 = arith.constant 0 : index
      %c0_25 = arith.constant 0 : index
      %39 = vector.load %arg6[%c0_24, %c0_25] : memref<8x1xf32, #tpu.memory_space<vmem>>, vector<8x1xf32>
      %40 = math.log %39 : vector<8x1xf32>
      %41 = arith.addf %38, %40 : vector<8x1xf32>
      %c0_26 = arith.constant 0 : index
      %c0_27 = arith.constant 0 : index
      %42 = vector.load %arg7[%c0_26, %c0_27] : memref<8x1xf32, #tpu.memory_space<vmem>>, vector<8x1xf32>
      %43 = arith.subf %41, %42 : vector<8x1xf32>
      %c0_28 = arith.constant 0 : index
      %c0_29 = arith.constant 0 : index
      %44 = vector.load %arg4[%c0_28, %c0_29] : memref<8x1xf32, #tpu.memory_space<vmem>>, vector<8x1xf32>
      tpu.vector_store %arg4[%c0_28, %c0_29], %43 {strides = array<i32>} : memref<8x1xf32, #tpu.memory_space<vmem>>, vector<8x1xf32>,
    } else {
    }
    return
  }
  func.func @transform_0(%arg0: i32, %arg1: i32) -> (i32, i32) {
    %c0_i32 = arith.constant 0 : i32
    %c0_i32_0 = arith.constant 0 : i32
    return %arg0, %c0_i32 : i32, i32
  }
  func.func @transform_1(%arg0: i32, %arg1: i32) -> (i32, i32) {
    %c0_i32 = arith.constant 0 : i32
    %c0_i32_0 = arith.constant 0 : i32
    return %arg1, %c0_i32 : i32, i32
  }
  func.func @transform_2(%arg0: i32, %arg1: i32) -> (i32, i32) {
    %c0_i32 = arith.constant 0 : i32
    %c0_i32_0 = arith.constant 0 : i32
    return %arg0, %c0_i32 : i32, i32
  }
}

</mosaic_0001>

<llo_original>
// kernel: _lambda_.1
$region0: #{_lambda_.1}
  #allocation0 [shape = 'u32[]', space=smem, size = 0x4, offset = 0x4, fixed_abs, tag = 'smem constant byte address 0x4 - core index']
  #allocation1 [shape = 'u32[72,128]{1,0:T(1,128)}', space=vmem, size = 0x9000, scoped, tag = 'internal scratch']
  #allocation2 [shape = 'f32[8,1]{1,0:T(8,128)}', space=vmem, size = 0x1000, scoped, tag = 'scratch operand']
  #allocation3 [shape = 'f32[8,1]{1,0:T(8,128)}', space=vmem, size = 0x1000, scoped, tag = 'scratch operand']
  #allocation4 [shape = 'f32[8,1]{1,0:T(8,128)}', space=vmem, size = 0x1000, scoped, tag = 'scratch operand']
  %s0 = inlined_call_operand.vmem [shape: bf16[8,128], index: 0, kind: input, shape index: {}]
  %s1 = inlined_call_operand.vmem [shape: bf16[8,128], index: 1, kind: input, shape index: {}]
  %s2 = inlined_call_operand.vmem [shape: f32[8,1], index: 2, kind: output, shape index: {}]
  %s3 = sld [smem:[#allocation0]]
  $region30: #{_lambda_.1} parent=0
    _
  %s5 = ssub.s32 1, %s3
  %s6 = scalar_select 0, %s5, %s3
  // Predicated region
  $region2: #{_lambda_.1} parent=0 // pred_check
    _
  $region3: #{_lambda_.1} parent=0 // pred_check_branch
    %8 = sbr.rel (0) target = $region5
  $region4: #{_lambda_.1} parent=0 // pred_region
    _
  $region5: #{_lambda_.1} parent=0 // pred_fallthru
    _
  // Predicated region
  $region6: #{_lambda_.1} parent=0 // pred_check
    _
  $region7: #{_lambda_.1} parent=0 // pred_check_branch
    %10 = sbr.rel (0) target = $region9
  $region8: #{_lambda_.1} parent=0 // pred_region
    _
  $region9: #{_lambda_.1} parent=0 // pred_fallthru
    _
  %p12 = scmp.eq.s32.totalorder 0, 0
  // Predicated region
  $region10: #{_lambda_.1} parent=0 // pred_check
    %p13 = pneg %p12
  $region11: #{_lambda_.1} parent=0 // pred_check_branch
    %15 = sbr.rel (%p13) target = $region13
  $region12: #{_lambda_.1} parent=0 // pred_region
    %vm16 = vcmask 7168
    %17 = vst.msk [vmem:[#allocation2] sm:$0xff] %vm16, -inf
    %18 = vst.msk [vmem:[#allocation3] sm:$0xff] %vm16, 0.0
    %19 = vst.msk [vmem:[#allocation4] sm:$0xff] %vm16, 0.0
  $region13: #{_lambda_.1} parent=0 // pred_fallthru
    _
  %v20 = vld [vmem:[%s0] sm:$0xf]
  %v21 = vld [vmem:[%s1] sm:$0xf]
  %22 = vmatpush.bf16.xpose.msra.mxu0 0
  %23 = vmatpush.bf16.xpose.msra.mxu0 0
  %24 = vmatpush.bf16.xpose.msra.mxu0 0
  %25 = vmatpush.bf16.xpose.msra.mxu0 0
  %26 = vmatpush.bf16.xpose.msra.mxu0 0
  %27 = vmatpush.bf16.xpose.msra.mxu0 0
  %28 = vmatpush.bf16.xpose.msra.mxu0 0
  %29 = vmatpush.bf16.xpose.msra.mxu0 %v21
  %30 = vmatmul.bf16.gmra.mxu0 %v20
  %v31 = vpop.f32.mrf.mxu0
  %v32 = vadd.f32 0.0, %v31
  %v33 = vpop.f32.mrf.mxu0
  %34 = vdwg.mxu0
  %v35 = vmul.f32 %v32, 10.0
  %v36 = vld [vmem:[#allocation2] sm:$0xff]
  %vm37 = vcmask 64512
  %v38 = vsel %vm37, %v35, -inf
  %39 = vmax.xlane.f32.xlu0 %v38
  %v40 = vpop.xlane.xlu0 %39
  %v41 = vmax.f32 %v36, %v40
  %v42 = vsub.f32 %v36, %v41
  %v43 = vmul.f32 %v42, 1.442695
  %v44 = vpow.pop %v43
  %v45 = vld [vmem:[#allocation3] sm:$0xff]
  %v46 = vmul.f32 %v44, %v45
  %48 = vset.pattern.permute.xlu0 0
  %49 = vperm.xlu0 %48, %v41
  %v50 = vpop.permute.xlu0 %49
  %v52 = vsub.f32 %v35, %v50
  %v53 = vmul.f32 %v52, 1.442695
  %v54 = vpow.pop %v53
  %v55 = vsel %vm37, %v54, 0.0
  %56 = vadd.xlane.f32.xlu0 %v55
  %v57 = vpop.xlane.xlu0 %56
  %v58 = vadd.f32 %v46, %v57
  %vm59 = vcmask 7168
  %60 = vst.msk [vmem:[#allocation3] sm:$0xff] %vm59, %v58
  %61 = vst.msk [vmem:[#allocation2] sm:$0xff] %vm59, %v41
  %s62 = smul.u32 0, 8
  %s63 = sadd.s32 0, 1
  %s64 = smul.u32 %s63, 8
  %p65 = scmp.lt.s32.totalorder %s62, %s64
  %s66 = sadd.s32 0, 1
  %s67 = smul.u32 %s66, 8
  %s68 = smul.u32 0, 8
  %p69 = scmp.gt.s32.totalorder %s67, %s68
  %p70 = pnand %p65, %p69
  %p71 = pneg %p70
  // Predicated region
  $region14: #{_lambda_.1} parent=0 // pred_check
    _
  $region15: #{_lambda_.1} parent=0 // pred_check_branch
    %73 = sbr.rel (%p70) target = $region17
  $region16: #{_lambda_.1} parent=0 // pred_region
    %v74 = vlaneseq
    %v75 = vshrl.u32 %v74, 7
    %v76 = vstv %s68
    %v77 = vadd.s32 %v76, %v75
    %v78 = vlaneseq
    %v79 = vand.u32 %v78, 127
    %v80 = vstv %s62
    %v81 = vadd.s32 %v80, %v79
    %v82 = vld [vmem:[#allocation4] sm:$0xff]
    %vm83 = vcmp.eq.s32.totalorder %v77, %v81
    %v84 = vsel %vm83, %v35, 0.0
    %v85 = vsel %vm37, %v84, 0.0
    %86 = vadd.xlane.f32.xlu0 %v85
    %v87 = vpop.xlane.xlu0 %86
    %v88 = vadd.f32 %v82, %v87
    %89 = vst.msk [vmem:[#allocation4] sm:$0xff] %vm59, %v88
  $region17: #{_lambda_.1} parent=0 // pred_fallthru
    _
  // Predicated region
  $region18: #{_lambda_.1} parent=0 // pred_check
    %p90 = pneg %p12
  $region19: #{_lambda_.1} parent=0 // pred_check_branch
    %92 = sbr.rel (%p90) target = $region21
  $region20: #{_lambda_.1} parent=0 // pred_region
    %v93 = vld [vmem:[#allocation2] sm:$0xff]
    %v94 = vld [vmem:[#allocation3] sm:$0xff]
    %v95 = vlog2.pop %v94
    %v96 = vmul.f32 %v95, 0.6931472
    %v97 = vadd.f32 %v93, %v96
    %v98 = vld [vmem:[#allocation4] sm:$0xff]
    %v99 = vsub.f32 %v97, %v98
    %100 = vst.msk [vmem:[%s2] sm:$0xff] %vm59, %v99
  $region21: #{_lambda_.1} parent=0 // pred_fallthru
    _
  // Predicated region
  $region22: #{_lambda_.1} parent=0 // pred_check
    _
  $region23: #{_lambda_.1} parent=0 // pred_check_branch
    %102 = sbr.rel (0) target = $region25
  $region24: #{_lambda_.1} parent=0 // pred_region
    _
  $region25: #{_lambda_.1} parent=0 // pred_fallthru
    _
  // Predicated region
  $region26: #{_lambda_.1} parent=0 // pred_check
    _
  $region27: #{_lambda_.1} parent=0 // pred_check_branch
    %104 = sbr.rel (0) target = $region29
  $region28: #{_lambda_.1} parent=0 // pred_region
    _
  $region29: #{_lambda_.1} parent=0 // pred_fallthru
    _

</llo_original>
